<compile_context>
chip_gen: v6e
topology: v6e:2x2x1
jax: 0.10.0
libtpu: 0.0.40
codegen_flags: <defaults>
</compile_context>

<pallas_src>
import functools

import jax
import jax.numpy as jnp
from jax.experimental import pallas as pl
from jax.experimental.pallas import tpu as pltpu

BN_EPS = 1e-5
ACT_DTYPE = jnp.bfloat16             # intermediate activation storage dtype
GEMM_DTYPE = jnp.bfloat16            # MXU operand dtype (f32 accumulation)
RESIDENT_B_BYTES = 6 * 1024 * 1024   # keep full weight matrix VMEM-resident below this
VMEM_LIMIT_BYTES = 32 * 1024 * 1024  # safe on v5e/v6e (128 MiB) and v7x (64 MiB) physical


def _round_up(x, m):
    return ((x + m - 1) // m) * m


def _tile_m(M):
    Mp = _round_up(M, 16)
    if Mp <= 256:
        return Mp, Mp
    return 256, _round_up(M, 256)


# ----------------------------------------------------------------------------
# Pallas kernels
# ----------------------------------------------------------------------------
def _gemm_bias_act_kernel(a_ref, b_ref, bias_ref, o_ref, *, act):
    # Full-K dot in a single MXU pass per tile; f32 accumulation + epilogue.
    r = jnp.dot(a_ref[...], b_ref[...], preferred_element_type=jnp.float32)
    r = r + bias_ref[...]                      # (tm, tn) + (1, tn) broadcast
    if act == "relu":
        r = jnp.maximum(r, 0.0)
    elif act == "sigmoid":
        r = jax.nn.sigmoid(r)
    o_ref[...] = r.astype(o_ref.dtype)


def _gemm_bias_res_relu_kernel(a_ref, b_ref, bias_ref, res_ref, o_ref):
    # Residual fused into the GEMM epilogue: relu(a @ b + bias + residual).
    r = jnp.dot(a_ref[...], b_ref[...], preferred_element_type=jnp.float32)
    r = r + bias_ref[...] + res_ref[...].astype(jnp.float32)
    o_ref[...] = jnp.maximum(r, 0.0).astype(o_ref.dtype)


# ----------------------------------------------------------------------------
# Pallas GEMM wrappers
# ----------------------------------------------------------------------------
def matmul_bias_act(a, b, bias, act="none", residual=None, out_dtype=ACT_DTYPE):
    """out = act(a @ b + bias [+ residual]); a:(M,K) b:(K,N) bias:(N,).

    Returns (M, Np) with N padded up to a 128 multiple (padded weight columns
    are zero, so padded output channels are exactly the padded bias/relu).
    """
    M, K = a.shape
    N = b.shape[1]
    tm, Mp = _tile_m(M)
    Kp = _round_up(K, 128)                      # single K grid step (max K ~4608)
    Np = _round_up(N, 128)
    tn = Np if Kp * Np * 2 <= RESIDENT_B_BYTES else 256
    Np = _round_up(Np, tn)

    a_p = jnp.pad(a.astype(GEMM_DTYPE), ((0, Mp - M), (0, Kp - K)))
    b_p = jnp.pad(b.astype(GEMM_DTYPE), ((0, Kp - K), (0, Np - N)))
    bias_p = jnp.pad(bias.astype(jnp.float32).reshape(1, -1),
                     ((0, 0), (0, Np - N)))

    in_specs = [
        pl.BlockSpec((tm, Kp), lambda i, j: (i, 0)),
        pl.BlockSpec((Kp, tn), lambda i, j: (0, j)),
        pl.BlockSpec((1, tn), lambda i, j: (0, j)),
    ]
    args = [a_p, b_p, bias_p]
    if residual is None:
        kernel = functools.partial(_gemm_bias_act_kernel, act=act)
    else:
        assert act == "relu"
        rM, rN = residual.shape
        res_p = jnp.pad(residual, ((0, Mp - rM), (0, Np - rN)))
        in_specs.append(pl.BlockSpec((tm, tn), lambda i, j: (i, j)))
        args.append(res_p)
        kernel = _gemm_bias_res_relu_kernel

    out = pl.pallas_call(
        kernel,
        out_shape=jax.ShapeDtypeStruct((Mp, Np), out_dtype),
        grid_spec=pltpu.PrefetchScalarGridSpec(
            num_scalar_prefetch=0,
            grid=(Mp // tm, Np // tn),
            in_specs=in_specs,
            out_specs=pl.BlockSpec((tm, tn), lambda i, j: (i, j)),
        ),
        compiler_params=pltpu.CompilerParams(
            dimension_semantics=("parallel", "parallel"),
            vmem_limit_bytes=VMEM_LIMIT_BYTES),
    )(*args)
    return out[:M, :]


def batched_matmul_bias_act(A, B, bias, act="none", out_dtype=ACT_DTYPE):
    """Phase-batched GEMM: A:(P,M,K) @ B:(P,K,N) + bias:(N,) in one pallas_call.

    Used for the 4 sub-pixel phases of a transposed conv; the phase axis is a
    leading grid dimension (squeezed out of the kernel refs).
    """
    P, M, K = A.shape
    N = B.shape[2]
    tm, Mp = _tile_m(M)
    Kp = _round_up(K, 128)
    Np = _round_up(N, 128)

    A_p = jnp.pad(A.astype(GEMM_DTYPE), ((0, 0), (0, Mp - M), (0, Kp - K)))
    B_p = jnp.pad(B.astype(GEMM_DTYPE), ((0, 0), (0, Kp - K), (0, Np - N)))
    bias_p = jnp.pad(bias.astype(jnp.float32).reshape(1, -1),
                     ((0, 0), (0, Np - N)))

    out = pl.pallas_call(
        functools.partial(_gemm_bias_act_kernel, act=act),
        out_shape=jax.ShapeDtypeStruct((P, Mp, Np), out_dtype),
        grid_spec=pltpu.PrefetchScalarGridSpec(
            num_scalar_prefetch=0,
            grid=(P, Mp // tm),
            in_specs=[
                pl.BlockSpec((None, tm, Kp), lambda p, i: (p, i, 0)),
                pl.BlockSpec((None, Kp, Np), lambda p, i: (p, 0, 0)),
                pl.BlockSpec((1, Np), lambda p, i: (0, 0)),
            ],
            out_specs=pl.BlockSpec((None, tm, Np), lambda p, i: (p, i, 0)),
        ),
        compiler_params=pltpu.CompilerParams(
            dimension_semantics=("parallel", "parallel"),
            vmem_limit_bytes=VMEM_LIMIT_BYTES),
    )(A_p, B_p, bias_p)
    return out[:, :M, :]


# ----------------------------------------------------------------------------
# Conv / deconv / pooling built on the Pallas GEMM (NHWC, channel-padded)
# ----------------------------------------------------------------------------
def conv2d_nhwc(x, w, b, stride=1, padding=0, act="none", residual=None,
                out_dtype=ACT_DTYPE):
    """Conv2d via im2col + Pallas GEMM.

    x: NHWC with physical channels >= logical IC (extra channels are ignored
    by zero-padded weight rows).  w: (OC, IC, KH, KW) PyTorch layout.
    Returns NHWC with OC padded up to a 128 multiple.
    """
    n, _, _, cphys = x.shape
    oc, ic, kh, kw = w.shape
    x = x.astype(GEMM_DTYPE)                    # cast BEFORE im2col expansion
    if padding:
        x = jnp.pad(x, ((0, 0), (padding, padding), (padding, padding), (0, 0)))
    hp, wp = x.shape[1], x.shape[2]
    oh = (hp - kh) // stride + 1
    ow = (wp - kw) // stride + 1
    # TODO(synk): implicit-GEMM (BlockSpec reading overlapping NHWC rows
    # straight from HBM) would avoid materializing the KH*KW*C patch tensor.
    cols = []
    for i in range(kh):
        for j in range(kw):
            cols.append(x[:, i:i + stride * oh:stride,
                            j:j + stride * ow:stride, :])
    patches = jnp.concatenate(cols, axis=-1)            # N,OH,OW,KH*KW*Cphys
    a = patches.reshape(n * oh * ow, kh * kw * cphys)

    w_t = jnp.transpose(w, (2, 3, 1, 0))                # KH,KW,IC,OC
    if cphys > ic:
        w_t = jnp.pad(w_t, ((0, 0), (0, 0), (0, cphys - ic), (0, 0)))
    wm = w_t.reshape(kh * kw * cphys, oc)

    res2d = None
    if residual is not None:
        res2d = residual.reshape(n * oh * ow, residual.shape[-1])

    out = matmul_bias_act(a, wm, b, act=act, residual=res2d,
                          out_dtype=out_dtype)
    return out.reshape(n, oh, ow, out.shape[-1])


def conv_transpose2d_nhwc(x, w, b, act="relu", out_dtype=ACT_DTYPE):
    """PyTorch ConvTranspose2d (k=4, stride=2, padding=1) via sub-pixel
    decomposition: 4 stride-1 phase GEMMs batched into one pallas_call."""
    n, h, wdim, cphys = x.shape
    ic, oc, kh, kw = w.shape
    assert (kh, kw) == (4, 4)
    x = x.astype(GEMM_DTYPE)
    xp = jnp.pad(x, ((0, 0), (1, 1), (1, 1), (0, 0)))
    w_p = w if cphys == ic else jnp.pad(
        w, ((0, cphys - ic), (0, 0), (0, 0), (0, 0)))
    # Output row y = 2m + r pulls padded-input rows {m, m+1} (r=0) or
    # {m+1, m+2} (r=1) with kernel taps ky = {3, 1} / {2, 0}; same for cols.
    taps = {0: ((0, 3), (1, 1)), 1: ((1, 2), (2, 0))}
    a_list, b_list = [], []
    for r in (0, 1):
        for s in (0, 1):
            cols, wrows = [], []
            for di, ky in taps[r]:
                for dj, kx in taps[s]:
                    cols.append(xp[:, di:di + h, dj:dj + wdim, :])
                    wrows.append(w_p[:, :, ky, kx])     # (Cphys, OC)
            a_list.append(jnp.concatenate(cols, -1).reshape(n * h * wdim,
                                                            4 * cphys))
            b_list.append(jnp.concatenate(wrows, axis=0))
    A = jnp.stack(a_list, axis=0)                       # (4, M, 4*Cphys)
    B = jnp.stack(b_list, axis=0)                       # (4, 4*Cphys, OC)
    out4 = batched_matmul_bias_act(A, B, b, act=act, out_dtype=out_dtype)
    ocp = out4.shape[-1]
    # Interleave phases: out[:, 2m+r, 2q+s, :] = phase[2r+s][:, m, q, :].
    out4 = out4.reshape(2, 2, n, h, wdim, ocp)
    out = jnp.transpose(out4, (2, 3, 0, 4, 1, 5)).reshape(n, 2 * h, 2 * wdim,
                                                          ocp)
    return out


def maxpool2d_nhwc(x, k=3, stride=2, padding=1):
    # cheap memory-bound glue: patch extraction + max in plain JAX
    x = jnp.pad(x, ((0, 0), (padding, padding), (padding, padding), (0, 0)),
                constant_values=-jnp.inf)
    h, w = x.shape[1], x.shape[2]
    oh = (h - k) // stride + 1
    ow = (w - k) // stride + 1
    parts = []
    for i in range(k):
        for j in range(k):
            parts.append(x[:, i:i + stride * oh:stride,
                             j:j + stride * ow:stride, :])
    return jnp.max(jnp.stack(parts, 0), axis=0)


def conv_bn(x, w, b, bn, stride, padding, act, residual=None,
            out_dtype=ACT_DTYPE):
    """Conv -> BatchNorm (inference, folded) -> activation in one GEMM."""
    gamma, beta, mean, var = bn
    scale = gamma / jnp.sqrt(var + BN_EPS)
    w_eff = w * scale[:, None, None, None]
    b0 = b if b is not None else jnp.zeros_like(mean)
    b_eff = (b0 - mean) * scale + beta
    return conv2d_nhwc(x, w_eff, b_eff, stride=stride, padding=padding,
                       act=act, residual=residual, out_dtype=out_dtype)


# ----------------------------------------------------------------------------
# ResNet18 backbone + CenterNet decoder (NHWC end-to-end)
# ----------------------------------------------------------------------------
def basic_block(x, p, stride):
    out = conv_bn(x, p["conv1_w"], None, p["bn1"], stride, 1, act="relu")
    if "down_w" in p:
        identity = conv_bn(x, p["down_w"], None, p["down_bn"], stride, 0,
                           act="none")
    else:
        identity = x
    # conv2 + BN + residual add + ReLU all fused into one GEMM epilogue.
    return conv_bn(out, p["conv2_w"], None, p["bn2"], 1, 1, act="relu",
                   residual=identity)


def centernet_forward(x_nchw, P):
    x = jnp.transpose(x_nchw, (0, 2, 3, 1))            # NHWC once at entry
    # f0 : conv7x7/s2 + bn + relu + maxpool3x3/s2
    x0 = conv_bn(x, P["conv1_w"], None, P["bn1"], stride=2, padding=3,
                 act="relu")
    x0 = maxpool2d_nhwc(x0)
    # layer1..layer4 (two BasicBlocks each)
    x1 = basic_block(x0, P["layer1"][0], 1)
    x1 = basic_block(x1, P["layer1"][1], 1)
    x2 = basic_block(x1, P["layer2"][0], 2)
    x2 = basic_block(x2, P["layer2"][1], 1)
    x3 = basic_block(x2, P["layer3"][0], 2)
    x3 = basic_block(x3, P["layer3"][1], 1)
    x4 = basic_block(x3, P["layer4"][0], 2)
    x4 = basic_block(x4, P["layer4"][1], 1)
    # decoder (conv+bn+relu then phase-batched deconv+relu, x3)
    up1 = conv_bn(x4, P["dconv1_w"], P["dconv1_b"], P["dbn1"], 1, 1, act="relu")
    up1 = conv_transpose2d_nhwc(up1, P["up1_w"], P["up1_b"], act="relu")
    up2 = conv_bn(up1, P["dconv2_w"], P["dconv2_b"], P["dbn2"], 1, 1, act="relu")
    up2 = conv_transpose2d_nhwc(up2, P["up2_w"], P["up2_b"], act="relu")
    up3 = conv_bn(up2, P["dconv3_w"], P["dconv3_b"], P["dbn3"], 1, 1, act="relu")
    up3 = conv_transpose2d_nhwc(up3, P["up3_w"], P["up3_b"], act="relu")
    # Fused heads: hm_conv1 + s_conv1 share up3's im2col (N = 256+256), then
    # hm_conv2 + s_conv2 merged into one block-diagonal 1x1 GEMM (N = C+2).
    C = P["hm2_w"].shape[0]
    head1_w = jnp.concatenate([P["hm1_w"], P["s1_w"]], axis=0)    # (512,64,3,3)
    head1_b = jnp.concatenate([P["hm1_b"], P["s1_b"]], axis=0)
    feat = conv2d_nhwc(up3, head1_w, head1_b, 1, 1, act="relu")   # (n,H,W,512)
    w2 = jnp.zeros((C + 2, 512, 1, 1), jnp.float32)
    w2 = w2.at[:C, :256].set(P["hm2_w"])
    w2 = w2.at[C:, 256:].set(P["s2_w"])
    b2 = jnp.concatenate([P["hm2_b"], P["s2_b"]], axis=0)
    out = conv2d_nhwc(feat, w2, b2, 1, 0, act="none",
                      out_dtype=jnp.float32)                      # (n,H,W,128)
    hm = jax.nn.sigmoid(out[..., :C])          # tiny per-head epilogue glue
    size = out[..., C:C + 2]
    return (jnp.transpose(hm, (0, 3, 1, 2)),
            jnp.transpose(size, (0, 3, 1, 2)))


# ----------------------------------------------------------------------------
# Deterministic synthetic parameters (no checkpoint loading)
# ----------------------------------------------------------------------------
def make_params(key, num_classes):
    keys = iter(jax.random.split(key, 256))

    def conv_w(oc, ic, kh, kw):
        fan = ic * kh * kw
        return jax.random.normal(next(keys), (oc, ic, kh, kw),
                                 jnp.float32) / jnp.sqrt(fan)

    def convT_w(ic, oc, kh, kw):
        fan = oc * kh * kw
        return jax.random.normal(next(keys), (ic, oc, kh, kw),
                                 jnp.float32) / jnp.sqrt(fan)

    def bias(c):
        return 0.01 * jax.random.normal(next(keys), (c,), jnp.float32)

    def bn(c):
        gamma = 1.0 + 0.1 * jax.random.normal(next(keys), (c,), jnp.float32)
        beta = 0.1 * jax.random.normal(next(keys), (c,), jnp.float32)
        return (gamma, beta, jnp.zeros((c,), jnp.float32),
                jnp.ones((c,), jnp.float32))

    def block(ic, oc, stride):
        p = {"conv1_w": conv_w(oc, ic, 3, 3), "bn1": bn(oc),
             "conv2_w": conv_w(oc, oc, 3, 3), "bn2": bn(oc)}
        if stride != 1 or ic != oc:
            p["down_w"] = conv_w(oc, ic, 1, 1)
            p["down_bn"] = bn(oc)
        return p

    P = {
        "conv1_w": conv_w(64, 3, 7, 7), "bn1": bn(64),
        "layer1": [block(64, 64, 1), block(64, 64, 1)],
        "layer2": [block(64, 128, 2), block(128, 128, 1)],
        "layer3": [block(128, 256, 2), block(256, 256, 1)],
        "layer4": [block(256, 512, 2), block(512, 512, 1)],
        "dconv1_w": conv_w(256, 512, 3, 3), "dconv1_b": bias(256), "dbn1": bn(256),
        "up1_w": convT_w(256, 256, 4, 4), "up1_b": bias(256),
        "dconv2_w": conv_w(128, 256, 3, 3), "dconv2_b": bias(128), "dbn2": bn(128),
        "up2_w": convT_w(128, 128, 4, 4), "up2_b": bias(128),
        "dconv3_w": conv_w(64, 128, 3, 3), "dconv3_b": bias(64), "dbn3": bn(64),
        "up3_w": convT_w(64, 64, 4, 4), "up3_b": bias(64),
        "hm1_w": conv_w(256, 64, 3, 3), "hm1_b": bias(256),
        "hm2_w": conv_w(num_classes, 256, 1, 1), "hm2_b": bias(num_classes),
        "s1_w": conv_w(256, 64, 3, 3), "s1_b": bias(256),
        "s2_w": conv_w(2, 256, 1, 1), "s2_b": bias(2),
    }
    return P


# ----------------------------------------------------------------------------
# Numerical sanity check of the sub-pixel ConvTranspose2d decomposition
# ----------------------------------------------------------------------------
def _conv_transpose_ref_nchw(x, w, b):
    # PyTorch ConvTranspose2d(k=4, s=2, p=1): dilate input, flip kernel.
    wf = jnp.transpose(jnp.flip(w, (2, 3)), (1, 0, 2, 3))      # (OC,IC,4,4)
    y = jax.lax.conv_general_dilated(
        x, wf, window_strides=(1, 1), padding=((2, 2), (2, 2)),
        lhs_dilation=(2, 2), dimension_numbers=("NCHW", "OIHW", "NCHW"))
    return y + b[None, :, None, None]


def _verify_conv_transpose(key):
    ic, oc, h = 8, 8, 4
    k1, k2, k3 = jax.random.split(key, 3)
    x = jax.random.normal(k1, (1, h, h, ic), jnp.float32)
    w = jax.random.normal(k2, (ic, oc, 4, 4), jnp.float32) / jnp.sqrt(16 * oc)
    b = 0.1 * jax.random.normal(k3, (oc,), jnp.float32)
    got = conv_transpose2d_nhwc(x, w, b, act="none", out_dtype=jnp.float32)
    got = jnp.transpose(got[..., :oc], (0, 3, 1, 2))
    ref = _conv_transpose_ref_nchw(jnp.transpose(x, (0, 3, 1, 2)), w, b)
    err = jnp.linalg.norm(got - ref) / (jnp.linalg.norm(ref) + 1e-6)
    assert float(err) < 5e-2, float(err)   # bf16-operand tolerance


if __name__ == "__main__":
    C = 3                                    # number of classes
    key = jax.random.PRNGKey(0)
    pkey, xkey, tkey = jax.random.split(key, 3)

    _verify_conv_transpose(tkey)             # sub-pixel deconv vs. dense ref

    params = make_params(pkey, C)
    # smallest input that survives the /32 backbone downsampling
    x = jax.random.normal(xkey, (2, 3, 64, 64), jnp.float32)

    fwd = jax.jit(centernet_forward)
    hm, size = fwd(x, params)
    jax.block_until_ready((hm, size))

    assert hm.shape == (2, C, 16, 16), hm.shape
    assert size.shape == (2, 2, 16, 16), size.shape
    assert bool(jnp.all(jnp.isfinite(hm))) and bool(jnp.all(jnp.isfinite(size)))
    assert bool(jnp.all(hm >= 0.0)) and bool(jnp.all(hm <= 1.0))  # sigmoid head
    print("KERNEL_OK")
</pallas_src>

<mosaic_0001>
module attributes {stable_mosaic.version = 11 : i64} {
  func.func @_gemm_bias_act_kernel(%arg0: i32, %arg1: i32, %arg2: memref<1x16x128xbf16, #tpu.memory_space<vmem>>, %arg3: memref<1x128x128xbf16, #tpu.memory_space<vmem>>, %arg4: memref<1x128xf32, #tpu.memory_space<vmem>>, %arg5: memref<1x16x128xf32, #tpu.memory_space<vmem>>) attributes {dimension_semantics = [#tpu.dimension_semantics<parallel>, #tpu.dimension_semantics<parallel>], iteration_bounds = array<i64: 4, 1>, scalar_prefetch = 0 : i64, scratch_operands = 0 : i64, tpu.core_type = #tpu.core_type<tc>, window_params = [{transform_indices = @transform_0, window_bounds = array<i64: 1, 16, 128>}, {transform_indices = @transform_1, window_bounds = array<i64: 1, 128, 128>}, {pipeline_mode = #tpu.pipeline_mode<synchronous>, transform_indices = @transform_2, window_bounds = array<i64: 1, 128>}, {transform_indices = @transform_3, window_bounds = array<i64: 1, 16, 128>}]} {
    %c0 = arith.constant 0 : index
    %c0_0 = arith.constant 0 : index
    %c0_1 = arith.constant 0 : index
    %0 = vector.load %arg2[%c0, %c0_0, %c0_1] : memref<1x16x128xbf16, #tpu.memory_space<vmem>>, vector<1x16x128xbf16>
    %1 = vector.shape_cast %0 : vector<1x16x128xbf16> to vector<16x128xbf16>
    %c0_2 = arith.constant 0 : index
    %c0_3 = arith.constant 0 : index
    %c0_4 = arith.constant 0 : index
    %2 = vector.load %arg3[%c0_2, %c0_3, %c0_4] : memref<1x128x128xbf16, #tpu.memory_space<vmem>>, vector<1x128x128xbf16>
    %3 = vector.shape_cast %2 : vector<1x128x128xbf16> to vector<128x128xbf16>
    %cst = arith.constant dense<0.000000e+00> : vector<16x128xf32>
    %4 = tpu.matmul %1, %3, %cst {dimension_numbers = #tpu.dot_dimension_numbers<[1], [0], [0], [1], [0, 0, 1, 1], [], []>} : vector<16x128xbf16>, vector<128x128xbf16>, vector<16x128xf32> -> vector<16x128xf32>
    %c0_5 = arith.constant 0 : index
    %c0_6 = arith.constant 0 : index
    %5 = vector.load %arg4[%c0_5, %c0_6] : memref<1x128xf32, #tpu.memory_space<vmem>>, vector<1x128xf32>
    %6 = vector.broadcast %5 : vector<1x128xf32> to vector<16x128xf32>
    %7 = arith.addf %4, %6 : vector<16x128xf32>
    %c0_7 = arith.constant 0 : index
    %c0_8 = arith.constant 0 : index
    %c0_9 = arith.constant 0 : index
    %8 = vector.load %arg5[%c0_7, %c0_8, %c0_9] : memref<1x16x128xf32, #tpu.memory_space<vmem>>, vector<1x16x128xf32>
    %9 = vector.shape_cast %8 : vector<1x16x128xf32> to vector<16x128xf32>
    %10 = vector.shape_cast %7 : vector<16x128xf32> to vector<1x16x128xf32>
    tpu.vector_store %arg5[%c0_7, %c0_8, %c0_9], %10 {strides = array<i32>} : memref<1x16x128xf32, #tpu.memory_space<vmem>>, vector<1x16x128xf32>,
    return
  }
  func.func @transform_0(%arg0: i32, %arg1: i32) -> (i32, i32, i32) {
    %c0_i32 = arith.constant 0 : i32
    %c0_i32_0 = arith.constant 0 : i32
    return %arg0, %arg1, %c0_i32 : i32, i32, i32
  }
  func.func @transform_1(%arg0: i32, %arg1: i32) -> (i32, i32, i32) {
    %c0_i32 = arith.constant 0 : i32
    %c0_i32_0 = arith.constant 0 : i32
    %c0_i32_1 = arith.constant 0 : i32
    return %arg0, %c0_i32, %c0_i32_0 : i32, i32, i32
  }
  func.func @transform_2(%arg0: i32, %arg1: i32) -> (i32, i32) {
    %c0_i32 = arith.constant 0 : i32
    %c0_i32_0 = arith.constant 0 : i32
    %c0_i32_1 = arith.constant 0 : i32
    return %c0_i32, %c0_i32_0 : i32, i32
  }
  func.func @transform_3(%arg0: i32, %arg1: i32) -> (i32, i32, i32) {
    %c0_i32 = arith.constant 0 : i32
    %c0_i32_0 = arith.constant 0 : i32
    return %arg0, %arg1, %c0_i32 : i32, i32, i32
  }
}

</mosaic_0001>

<llo_original>
// kernel: tpu_custom_call.1
$region0: #{tpu_custom_call.1}
  #allocation0 [shape = 'u32[]', space=smem, size = 0x4, offset = 0x4, fixed_abs, tag = 'smem constant byte address 0x4 - core index']
  #allocation1 [shape = 'u32[144,128]{1,0:T(1,128)}', space=vmem, size = 0x12000, scoped, tag = 'internal scratch']
  %s0 = inlined_call_operand.hbm [shape: bf16[4,16,128], index: 0, kind: input, shape index: {}]
  %s1 = inlined_call_operand.hbm [shape: bf16[4,128,128], index: 1, kind: input, shape index: {}]
  %s2 = inlined_call_operand.vmem [shape: f32[1,128], index: 2, kind: input, shape index: {}]
  %s3 = inlined_call_operand.hbm [shape: f32[4,16,128], index: 3, kind: output, shape index: {}]
  %s4 = sld [smem:[#allocation0]]
  $region53: #{tpu_custom_call.1} parent=0
    _
  %s6 = ssub.s32 1, %s4
  %s7 = scalar_select 0, %s6, %s4
  $region1: #{tpu_custom_call.1} parent=0
    #allocation2 [shape = 'u8[8192]{0}', space=vmem, size = 0x2000, scoped, tag = 'input window, operand 0']
    #allocation3 [shape = 's32[2]{0}', space=sflag, size = 0x8, scoped, tag = 'scoped memory for tpu_custom_call.1']
    #allocation4 [shape = 's32[2]{0}', space=sflag, size = 0x8, scoped, tag = 'scoped memory for tpu_custom_call.1']
    #allocation5 [shape = 'u8[65536]{0}', space=vmem, size = 0x10000, scoped, tag = 'input window, operand 1']
    #allocation6 [shape = 's32[2]{0}', space=sflag, size = 0x8, scoped, tag = 'scoped memory for tpu_custom_call.1']
    #allocation7 [shape = 'u8[16384]{0}', space=vmem, size = 0x4000, scoped, tag = 'output window, operand 0']
    %8 = vsyncpa [#allocation3], 0
    %s9 = scalar_lea.sflag [#allocation3], 1
    %10 = vsyncpa %s9, 0
    %11 = vsyncpa [#allocation6], 0
    %s12 = scalar_lea.sflag [#allocation6], 1
    %13 = vsyncpa %s12, 0
    %14 = vsyncpa [#allocation4], 0
    %s15 = scalar_lea.sflag [#allocation4], 1
    %16 = vsyncpa %s15, 0
    loop: start=0, step=1, limit=6
    $region2: #{tpu_custom_call.1} parent=1 // loop_pre_header
      _
    $region3: #{tpu_custom_call.1} parent=1 // loop_header
      %s18 = sphi 0, %s22
      %p19 = scmp.ge.s32.totalorder %s18, 6
      %s25 = sphi 0, %s37
      %s26 = sphi 0, %s33
      %s27 = sphi 0, %s25
      %s28 = sphi 0, %s26
      %s29 = sphi 0, %s27
      %s30 = sphi 0, %s28
      %s42 = sphi 0, %s44
      %s45 = sphi 0, %s42
      %s46 = sphi 0, %s45
      %s62 = sphi 0, %s46
      %s68 = sphi 0, %s70
      %s71 = sphi 0, %s68
      %s72 = sphi 0, %s71
      %s88 = sphi 0, %s72
      %s92 = sphi 0, %s92
      %s94 = sphi 0, %s92
      %s95 = sphi 0, %s94
      %s109 = sphi 0, %s95
      %s117 = sphi 0, %s119
      %s120 = sphi 0, %s117
      %s121 = sphi 0, %s120
      %s137 = sphi 0, %s121
    $region4: #{tpu_custom_call.1} parent=1 // loop_header_branch
      %21 = sbr.rel (%p19) target = $region8
    $region5: #{tpu_custom_call.1} parent=1 // loop_body
      %s23 = ssub.s32 %s18, 1
      %s24 = ssub.s32 %s18, 2
      %s31 = sadd.s32 1, %s26
      %p32 = scmp.ge.s32.totalorder %s31, 1
      %s33 = scalar_select %p32, 0, %s31
      %s34 = sadd.s32 1, %s25
      %s35 = scalar_select %p32, %s34, %s25
      %p36 = scmp.ge.s32.totalorder %s35, 4
      %s37 = scalar_select %p36, 0, %s35
      %s38 = ssub.s32 %s25, %s37
      %s39 = ssub.s32 %s26, %s33
      %s40 = sor.u32 %s38, %s39
      %p41 = scmp.eq.s32.totalorder %s40, 0
      %s43 = sadd.s32 %s42, 1
      %s44 = scalar_select %p41, %s42, %s43
      %p47 = pneg %p41
      %p48 = scmp.eq.s32.totalorder %s18, 3
      %p49 = por %p47, %p48
      %p50 = scmp.ne.s32.totalorder %s42, %s45
      %p51 = scmp.eq.s32.totalorder %s18, 0
      %p52 = por %p50, %p51
      %p53 = scmp.ne.s32.totalorder %s42, %s45
      %p54 = scmp.eq.s32.totalorder %s23, 3
      %p55 = por %p53, %p54
      %p56 = scmp.ne.s32.totalorder %s45, %s46
      %p57 = scmp.eq.s32.totalorder %s23, 0
      %p58 = por %p56, %p57
      %p59 = scmp.ne.s32.totalorder %s45, %s46
      %p60 = scmp.eq.s32.totalorder %s24, 3
      %p61 = por %p59, %p60
      %p63 = scmp.ne.s32.totalorder %s46, %s62
      %p64 = scmp.eq.s32.totalorder %s24, 0
      %p65 = por %p63, %p64
      %s66 = ssub.s32 %s25, %s37
      %p67 = scmp.eq.s32.totalorder %s66, 0
      %s69 = sadd.s32 %s68, 1
      %s70 = scalar_select %p67, %s68, %s69
      %p73 = pneg %p67
      %p74 = scmp.eq.s32.totalorder %s18, 3
      %p75 = por %p73, %p74
      %p76 = scmp.ne.s32.totalorder %s68, %s71
      %p77 = scmp.eq.s32.totalorder %s18, 0
      %p78 = por %p76, %p77
      %p79 = scmp.ne.s32.totalorder %s68, %s71
      %p80 = scmp.eq.s32.totalorder %s23, 3
      %p81 = por %p79, %p80
      %p82 = scmp.ne.s32.totalorder %s71, %s72
      %p83 = scmp.eq.s32.totalorder %s23, 0
      %p84 = por %p82, %p83
      %p85 = scmp.ne.s32.totalorder %s71, %s72
      %p86 = scmp.eq.s32.totalorder %s24, 3
      %p87 = por %p85, %p86
      %p89 = scmp.ne.s32.totalorder %s72, %s88
      %p90 = scmp.eq.s32.totalorder %s24, 0
      %p91 = por %p89, %p90
      %s93 = sadd.s32 %s92, 1
      %p96 = scmp.eq.s32.totalorder %s18, 3
      %p97 = scmp.ne.s32.totalorder %s92, %s94
      %p98 = scmp.eq.s32.totalorder %s18, 0
      %p99 = por %p97, %p98
      %p100 = scmp.ne.s32.totalorder %s92, %s94
      %p101 = scmp.eq.s32.totalorder %s23, 3
      %p102 = por %p100, %p101
      %p103 = scmp.ne.s32.totalorder %s94, %s95
      %p104 = scmp.eq.s32.totalorder %s23, 0
      %p105 = por %p103, %p104
      %p106 = scmp.ne.s32.totalorder %s94, %s95
      %p107 = scmp.eq.s32.totalorder %s24, 3
      %p108 = por %p106, %p107
      %p110 = scmp.ne.s32.totalorder %s95, %s109
      %p111 = scmp.eq.s32.totalorder %s24, 0
      %p112 = por %p110, %p111
      %s113 = ssub.s32 %s25, %s37
      %s114 = ssub.s32 %s26, %s33
      %s115 = sor.u32 %s113, %s114
      %p116 = scmp.eq.s32.totalorder %s115, 0
      %s118 = sadd.s32 %s117, 1
      %s119 = scalar_select %p116, %s117, %s118
      %p122 = pneg %p116
      %p123 = scmp.eq.s32.totalorder %s18, 3
      %p124 = por %p122, %p123
      %p125 = scmp.ne.s32.totalorder %s117, %s120
      %p126 = scmp.eq.s32.totalorder %s18, 0
      %p127 = por %p125, %p126
      %p128 = scmp.ne.s32.totalorder %s117, %s120
      %p129 = scmp.eq.s32.totalorder %s23, 3
      %p130 = por %p128, %p129
      %p131 = scmp.ne.s32.totalorder %s120, %s121
      %p132 = scmp.eq.s32.totalorder %s23, 0
      %p133 = por %p131, %p132
      %p134 = scmp.ne.s32.totalorder %s120, %s121
      %p135 = scmp.eq.s32.totalorder %s24, 3
      %p136 = por %p134, %p135
      %p138 = scmp.ne.s32.totalorder %s121, %s137
      %p139 = scmp.eq.s32.totalorder %s24, 0
      %p140 = por %p138, %p139
      %p141 = scmp.le.s32.totalorder 1, %s18
      %p142 = scmp.lt.s32.totalorder %s18, 5
      %p143 = pnand %p141, %p142
      %p144 = pneg %p143
      // Predicated region
      $region9: #{tpu_custom_call.1} parent=5 // pred_check
        _
      $region10: #{tpu_custom_call.1} parent=5 // pred_check_branch
        %146 = sbr.rel (%p143) target = $region12
      $region11: #{tpu_custom_call.1} parent=5 // pred_region
        %s147 = ssub.s32 %s18, 1
        // Predicated region
        $region13: #{tpu_custom_call.1} parent=11 // pred_check
          %p148 = pneg %p105
        $region14: #{tpu_custom_call.1} parent=11 // pred_check_branch
          %150 = sbr.rel (%p148) target = $region16
        $region15: #{tpu_custom_call.1} parent=11 // pred_region
          _
        $region16: #{tpu_custom_call.1} parent=11 // pred_fallthru
          _
      $region12: #{tpu_custom_call.1} parent=5 // pred_fallthru
        _
      %p151 = scmp.lt.s32.totalorder %s18, 4
      // Predicated region
      $region17: #{tpu_custom_call.1} parent=5 // pred_check
        %p152 = pneg %p151
      $region18: #{tpu_custom_call.1} parent=5 // pred_check_branch
        %154 = sbr.rel (%p152) target = $region20
      $region19: #{tpu_custom_call.1} parent=5 // pred_region
        // Predicated region
        $region21: #{tpu_custom_call.1} parent=19 // pred_check
          %p155 = pneg %p52
        $region22: #{tpu_custom_call.1} parent=19 // pred_check_branch
          %157 = sbr.rel (%p155) target = $region24
        $region23: #{tpu_custom_call.1} parent=19 // pred_region
          %s158 = sand.u32 %s42, 1
          %s159 = scalar_lea.sflag [#allocation3], %s158
          %s160 = sand.u32 %s42, 1
          %s161 = smul.addr %s160, 8
          %s162 = scalar_lea.vmem [#allocation2], %s161
          %s163 = smul.u32 2, %s26
          %s165 = ssub.s32 128, 128
          %166 = vsyncadd %s159, %s165
          %s167 = smul.addr %s25, 2
          %s168 = sadd.s32 %s163, %s167
          %s169 = smul.addr %s168, 64
          %s170 = scalar_lea.hbm %s0, %s169
          %s171 = sshll.u32 %s162, 4
          %s172 = int_to_ptr.vmem [resolvable:$true] %s171
          %177 = dma.hbm_to_vmem [thread:$0]  %s170, 128, %s172, %s159, 64, 64, 4
        $region24: #{tpu_custom_call.1} parent=19 // pred_fallthru
          _
        // Predicated region
        $region25: #{tpu_custom_call.1} parent=19 // pred_check
          %p178 = pneg %p78
        $region26: #{tpu_custom_call.1} parent=19 // pred_check_branch
          %180 = sbr.rel (%p178) target = $region28
        $region27: #{tpu_custom_call.1} parent=19 // pred_region
          %s181 = sand.u32 %s68, 1
          %s182 = scalar_lea.sflag [#allocation6], %s181
          %s183 = sand.u32 %s68, 1
          %s184 = smul.addr %s183, 64
          %s185 = scalar_lea.vmem [#allocation5], %s184
          %s187 = ssub.s32 1024, 1024
          %188 = vsyncadd %s182, %s187
          %s189 = smul.addr %s25, 16
          %s190 = smul.addr %s189, 64
          %s191 = scalar_lea.hbm %s1, %s190
          %s192 = sshll.u32 %s185, 4
          %s193 = int_to_ptr.vmem [resolvable:$true] %s192
          %198 = dma.hbm_to_vmem [thread:$0]  %s191, 1024, %s193, %s182, 64, 64, 4
        $region28: #{tpu_custom_call.1} parent=19 // pred_fallthru
          _
      $region20: #{tpu_custom_call.1} parent=5 // pred_fallthru
        _
      %p199 = scmp.le.s32.totalorder 1, %s18
      %p200 = scmp.lt.s32.totalorder %s18, 5
      %p201 = pnand %p199, %p200
      %p202 = pneg %p201
      // Predicated region
      $region29: #{tpu_custom_call.1} parent=5 // pred_check
        _
      $region30: #{tpu_custom_call.1} parent=5 // pred_check_branch
        %204 = sbr.rel (%p201) target = $region32
      $region31: #{tpu_custom_call.1} parent=5 // pred_region
        %s205 = ssub.s32 %s18, 1
        %s206 = sand.u32 %s45, 1
        %s207 = scalar_lea.sflag [#allocation3], %s206
        %s208 = sand.u32 %s45, 1
        %s209 = smul.addr %s208, 8
        %s210 = scalar_lea.vmem [#allocation2], %s209
        // Predicated region
        $region33: #{tpu_custom_call.1} parent=31 // pred_check
          %p211 = pneg %p58
        $region34: #{tpu_custom_call.1} parent=31 // pred_check_branch
          %213 = sbr.rel (%p211) target = $region36
        $region35: #{tpu_custom_call.1} parent=31 // pred_region
          %214 = dma.done %s207, 128
        $region36: #{tpu_custom_call.1} parent=31 // pred_fallthru
          _
        %s215 = sand.u32 %s71, 1
        %s216 = scalar_lea.sflag [#allocation6], %s215
        %s217 = sand.u32 %s71, 1
        %s218 = smul.addr %s217, 64
        %s219 = scalar_lea.vmem [#allocation5], %s218
        // Predicated region
        $region37: #{tpu_custom_call.1} parent=31 // pred_check
          %p220 = pneg %p84
        $region38: #{tpu_custom_call.1} parent=31 // pred_check_branch
          %222 = sbr.rel (%p220) target = $region40
        $region39: #{tpu_custom_call.1} parent=31 // pred_region
          %223 = dma.done %s216, 1024
        $region40: #{tpu_custom_call.1} parent=31 // pred_fallthru
          _
        %s224 = sand.u32 %s45, 1
        %s225 = scalar_lea.sflag [#allocation3], %s224
        %s226 = sand.u32 %s45, 1
        %s227 = smul.addr %s226, 8
        %s228 = scalar_lea.vmem [#allocation2], %s227
        %p229 = pneg %p58
        %p230 = pneg %p55
        %s231 = sand.u32 %s71, 1
        %s232 = scalar_lea.sflag [#allocation6], %s231
        %s233 = sand.u32 %s71, 1
        %s234 = smul.addr %s233, 64
        %s235 = scalar_lea.vmem [#allocation5], %s234
        %p236 = pneg %p84
        %p237 = pneg %p81
        %p238 = pneg %p105
        %p239 = pneg %p102
        %p240 = pneg %p133
        %p241 = pneg %p130
        %s242 = sand.u32 %s120, 1
        %s243 = scalar_lea.sflag [#allocation4], %s242
        %s244 = sand.u32 %s120, 1
        %s245 = smul.addr %s244, 16
        %s246 = scalar_lea.vmem [#allocation7], %s245
        %s247 = smul.u32 2, %s28
        %s248 = smul.u32 2, %s28
        %v250 = vld [vmem:[%s210] sm:$0xf]
        %v251 = vld [vmem:[%s210 + $0x4] sm:$0xf]
        %v252 = vld [vmem:[%s219] sm:$0xf]
        %v253 = vld [vmem:[%s219 + $0x4] sm:$0xf]
        %v254 = vld [vmem:[%s219 + $0x8] sm:$0xf]
        %v255 = vld [vmem:[%s219 + $0xc] sm:$0xf]
        %v256 = vld [vmem:[%s219 + $0x10] sm:$0xf]
        %v257 = vld [vmem:[%s219 + $0x14] sm:$0xf]
        %v258 = vld [vmem:[%s219 + $0x18] sm:$0xf]
        %v259 = vld [vmem:[%s219 + $0x1c] sm:$0xf]
        %v260 = vld [vmem:[%s219 + $0x20] sm:$0xf]
        %v261 = vld [vmem:[%s219 + $0x24] sm:$0xf]
        %v262 = vld [vmem:[%s219 + $0x28] sm:$0xf]
        %v263 = vld [vmem:[%s219 + $0x2c] sm:$0xf]
        %v264 = vld [vmem:[%s219 + $0x30] sm:$0xf]
        %v265 = vld [vmem:[%s219 + $0x34] sm:$0xf]
        %v266 = vld [vmem:[%s219 + $0x38] sm:$0xf]
        %v267 = vld [vmem:[%s219 + $0x3c] sm:$0xf]
        %v268 = vld [vmem:[%s2] sm:$0x1]
        %v270 = vlaneseq
        %v271 = vshrl.u32 %v270, 7
        %v272 = vsub.s32 0, %v271
        %v273 = vrot.slane %v268, %v272
        %v277 = vunpack.c.l.b16 %v250
        %v278 = vunpack.c.l.b16 %v251
        %v279 = vpack.c.b16 %v278, %v277
        %v297 = vunpack.c.l.b16 %v252
        %v298 = vunpack.c.l.b16 %v253
        %v299 = vunpack.c.l.b16 %v254
        %v300 = vunpack.c.l.b16 %v255
        %v301 = vunpack.c.l.b16 %v256
        %v302 = vunpack.c.l.b16 %v257
        %v303 = vunpack.c.l.b16 %v258
        %v304 = vunpack.c.l.b16 %v259
        %v305 = vunpack.c.l.b16 %v260
        %v306 = vunpack.c.l.b16 %v261
        %v307 = vunpack.c.l.b16 %v262
        %v308 = vunpack.c.l.b16 %v263
        %v309 = vunpack.c.l.b16 %v264
        %v310 = vunpack.c.l.b16 %v265
        %v311 = vunpack.c.l.b16 %v266
        %v312 = vunpack.c.l.b16 %v267
        %v313 = vpack.c.b16 %v298, %v297
        %v314 = vpack.c.b16 %v300, %v299
        %v315 = vpack.c.b16 %v302, %v301
        %v316 = vpack.c.b16 %v304, %v303
        %v317 = vpack.c.b16 %v306, %v305
        %v318 = vpack.c.b16 %v308, %v307
        %v319 = vpack.c.b16 %v310, %v309
        %v320 = vpack.c.b16 %v312, %v311
        %329 = vmatprep.subr.bf16.mxu0 0
        %330 = vmatpush1.bf16.msra.mxu0 %v320
        %331 = vmatprep.subr.bf16.mxu0 0
        %332 = vmatpush1.bf16.msra.mxu0 %v319
        %333 = vmatprep.subr.bf16.mxu0 0
        %334 = vmatpush1.bf16.msra.mxu0 %v318
        %335 = vmatprep.subr.bf16.mxu0 0
        %336 = vmatpush1.bf16.msra.mxu0 %v317
        %337 = vmatprep.subr.bf16.mxu0 0
        %338 = vmatpush1.bf16.msra.mxu0 %v316
        %339 = vmatprep.subr.bf16.mxu0 0
        %340 = vmatpush1.bf16.msra.mxu0 %v315
        %341 = vmatprep.subr.bf16.mxu0 0
        %342 = vmatpush1.bf16.msra.mxu0 %v314
        %343 = vmatprep.subr.bf16.mxu0 0
        %344 = vmatpush1.bf16.msra.mxu0 %v313
        %345 = vmatprep.subr.bf16.mxu0 0
        %346 = vmatpush2.bf16.msra.mxu0 0
        %347 = vmatprep.subr.bf16.mxu0 0
        %348 = vmatpush2.bf16.msra.mxu0 0
        %349 = vmatprep.subr.bf16.mxu0 0
        %350 = vmatpush2.bf16.msra.mxu0 0
        %351 = vmatprep.subr.bf16.mxu0 0
        %352 = vmatpush2.bf16.msra.mxu0 0
        %353 = vmatprep.subr.bf16.mxu0 0
        %354 = vmatpush2.bf16.msra.mxu0 0
        %355 = vmatprep.subr.bf16.mxu0 0
        %356 = vmatpush2.bf16.msra.mxu0 0
        %357 = vmatprep.subr.bf16.mxu0 0
        %358 = vmatpush2.bf16.msra.mxu0 0
        %359 = vmatprep.subr.bf16.mxu0 0
        %360 = vmatpush2.bf16.msra.mxu0 0
        %361 = vmatprep.mubr.bf16.mxu0 0
        %362 = vmatmul.mubr.bf16.gmra.mxu0 %v279
        %v363 = vpop.f32.mrf.mxu0
        %v364 = vadd.f32 %v273, %v363
        %v365 = vpop.f32.mrf.mxu0
        %v366 = vpop.f32.mrf.mxu0
        %v367 = vadd.f32 %v273, %v366
        %v368 = vpop.f32.mrf.mxu0
        %369 = vdwg.mxu0
        %370 = vst [vmem:[%s246] sm:$0xff] %v364
        %371 = vst [vmem:[%s246 + $0x8] sm:$0xff] %v367
        %s372 = sand.u32 %s120, 1
        %s373 = scalar_lea.sflag [#allocation4], %s372
        %s374 = sand.u32 %s120, 1
        %s375 = smul.addr %s374, 16
        %s376 = scalar_lea.vmem [#allocation7], %s375
        // Predicated region
        $region41: #{tpu_custom_call.1} parent=31 // pred_check
          %p377 = pneg %p130
        $region42: #{tpu_custom_call.1} parent=31 // pred_check_branch
          %379 = sbr.rel (%p377) target = $region44
        $region43: #{tpu_custom_call.1} parent=31 // pred_region
          %s380 = smul.u32 2, %s28
          %s382 = ssub.s32 256, 256
          %383 = vsyncadd %s373, %s382
          %s384 = smul.addr %s27, 2
          %s385 = sadd.s32 %s380, %s384
          %s386 = smul.addr %s385, 128
          %s387 = scalar_lea.hbm %s3, %s386
          %s388 = sshll.u32 %s376, 4
          %s389 = int_to_ptr.vmem [resolvable:$true] %s388
          %394 = dma.vmem_to_hbm [thread:$0]  %s389, 256, %s387, %s373, 128, 128, 8
        $region44: #{tpu_custom_call.1} parent=31 // pred_fallthru
          _
      $region32: #{tpu_custom_call.1} parent=5 // pred_fallthru
        _
      %p395 = scmp.le.s32.totalorder 2, %s18
      // Predicated region
      $region45: #{tpu_custom_call.1} parent=5 // pred_check
        %p396 = pneg %p395
      $region46: #{tpu_custom_call.1} parent=5 // pred_check_branch
        %398 = sbr.rel (%p396) target = $region48
      $region47: #{tpu_custom_call.1} parent=5 // pred_region
        %s399 = ssub.s32 %s18, 2
        // Predicated region
        $region49: #{tpu_custom_call.1} parent=47 // pred_check
          %p400 = pneg %p136
        $region50: #{tpu_custom_call.1} parent=47 // pred_check_branch
          %402 = sbr.rel (%p400) target = $region52
        $region51: #{tpu_custom_call.1} parent=47 // pred_region
          %s403 = sand.u32 %s121, 1
          %s404 = scalar_lea.sflag [#allocation4], %s403
          %s405 = sand.u32 %s121, 1
          %s406 = smul.addr %s405, 16
          %s407 = scalar_lea.vmem [#allocation7], %s406
          %408 = dma.done %s404, 256
        $region52: #{tpu_custom_call.1} parent=47 // pred_fallthru
          _
      $region48: #{tpu_custom_call.1} parent=5 // pred_fallthru
        _
    $region6: #{tpu_custom_call.1} parent=1 // loop_footer
      %s22 = sadd.s32 1, %s18
    $region7: #{tpu_custom_call.1} parent=1 // loop_footer_branch
      %17 = sbr.rel target = $region3
    $region8: #{tpu_custom_call.1} parent=1 // loop_exit
      _
    %409 = vsyncpa [#allocation3], 1
    %s410 = scalar_lea.sflag [#allocation3], 1
    %411 = vsyncpa %s410, 1
    %412 = vsyncpa [#allocation6], 1
    %s413 = scalar_lea.sflag [#allocation6], 1
    %414 = vsyncpa %s413, 1
    %415 = vsyncpa [#allocation4], 1
    %s416 = scalar_lea.sflag [#allocation4], 1
    %417 = vsyncpa %s416, 1

</llo_original>
